<compile_context>
chip_gen: v7x
topology: tpu7x:2x2x1
jax: 0.10.0
libtpu: 0.0.40
codegen_flags: <defaults>
</compile_context>

<pallas_src>
import functools

import jax
import jax.numpy as jnp
from jax import lax
from jax.experimental import pallas as pl
from jax.experimental.pallas import tpu as pltpu


# ----------------------------------------------------------------------------
# Stage 1: adjacency + Chebyshev propagation, batch folded into lanes.
# ----------------------------------------------------------------------------
def _cheb_prop_kernel(e_ref, xf_ref, xg_ref, *, mxu_dtype):
    f32 = jnp.float32
    E = e_ref[...].astype(f32)            # (N, D)
    X = xf_ref[...].astype(f32)           # (N, B*C)
    K = xg_ref.shape[0]
    cd = mxu_dtype                        # MXU operand dtype for the propagation

    # A = softmax(relu(E @ E^T), axis=1) -- kept in f32 for accuracy.
    S = lax.dot_general(E, E, (((1,), (1,)), ((), ())),
                        preferred_element_type=f32)          # (N, N)
    S = jnp.maximum(S, 0.0)
    S = S - jnp.max(S, axis=1, keepdims=True)
    P = jnp.exp(S)
    s = jnp.sum(P, axis=1, keepdims=True)
    r = pl.reciprocal(s, approx=True)     # EUP slot
    r = r * (2.0 - s * r)                 # one Newton step -> near-f32 accuracy
    A = P * r                             # (N, N)
    Acd = A.astype(cd)

    # T_0 @ X = X ; T_1 = A ; T_k = 2 A T_{k-1} - T_{k-2}, carried on XG_k = T_k @ X.
    xg_ref[0] = X.astype(xg_ref.dtype)
    xg_prev = X
    xg_cur = jnp.dot(Acd, X.astype(cd), preferred_element_type=f32)   # (N, B*C)
    xg_ref[1] = xg_cur.astype(xg_ref.dtype)
    for k in range(2, K):
        xg_next = (2.0 * jnp.dot(Acd, xg_cur.astype(cd),
                                 preferred_element_type=f32)) - xg_prev
        xg_ref[k] = xg_next.astype(xg_ref.dtype)
        xg_prev, xg_cur = xg_cur, xg_next


# ----------------------------------------------------------------------------
# Stage 2: per (batch, node-tile) contraction + epilogue.
# ----------------------------------------------------------------------------
def _gconv_kernel(xgu_ref, e_ref, wp_ref, bias_ref, out_ref, *, mxu_dtype):
    f32 = jnp.float32
    cd = mxu_dtype
    xgu = xgu_ref[...].astype(cd)         # (TN, K*C)  stacked Chebyshev features
    E = e_ref[...].astype(f32)            # (TN, D)    node embeddings for this tile
    D = wp_ref.shape[0]

    # bias[n, o] = sum_d E[n, d] * bias_pool[d, o] -- tiny MXU matmul, f32.
    acc = jnp.dot(E, bias_ref[...].astype(f32), preferred_element_type=f32)  # (TN, O)

    # out[n, o] += sum_d E[n, d] * (XGU[n, :] @ Wp[d, :, o]); no (TN, D*O) intermediate.
    for d in range(D):
        part = jnp.dot(xgu, wp_ref[d].astype(cd),
                       preferred_element_type=f32)            # (TN, O)
        acc = acc + part * E[:, d:d + 1]                      # lane-broadcast E column
    out_ref[...] = acc.astype(out_ref.dtype)


# ----------------------------------------------------------------------------
# Wrapper.
# ----------------------------------------------------------------------------
def avwgcn_forward(x, node_embeddings, weights_pool, bias_pool, cheb_k,
                   mxu_dtype=jnp.float32, node_tile=512):
    B, N, C = x.shape
    D, K, C2, O = weights_pool.shape
    assert K == cheb_k and C2 == C and node_embeddings.shape == (N, D)
    assert cheb_k >= 2, "module semantics require cheb_k >= 2"

    vmem_cap = 32 * 1024 * 1024   # headroom under v7x's 64 MiB physical VMEM

    # ---- Stage 1: A + Chebyshev propagation (whole problem is small: N x N + K x N x B*C).
    xf = jnp.transpose(x, (1, 0, 2)).reshape(N, B * C)        # fold batch into lanes
    xg = pl.pallas_call(
        functools.partial(_cheb_prop_kernel, mxu_dtype=mxu_dtype),
        out_shape=jax.ShapeDtypeStruct((K, N, B * C), jnp.float32),
        in_specs=[pl.BlockSpec(memory_space=pltpu.MemorySpace.VMEM)] * 2,
        out_specs=pl.BlockSpec(memory_space=pltpu.MemorySpace.VMEM),
        compiler_params=pltpu.CompilerParams(vmem_limit_bytes=vmem_cap),
    )(node_embeddings, xf)

    # Layout plumbing in plain XLA (outside the kernel):
    # (K, N, B*C) -> (B, N, K*C): the batch unfold happens exactly once.
    xgu = xg.reshape(K, N, B, C).transpose(2, 1, 0, 3).reshape(B, N, K * C)
    wp = weights_pool.reshape(D, K * C, O)                    # wp[d, k*C+c, o]

    # ---- Stage 2: gridded contraction + epilogue over (batch, node tiles).
    tn = N if (N <= node_tile or N % node_tile != 0) else node_tile
    grid = (B, N // tn)

    out = pl.pallas_call(
        functools.partial(_gconv_kernel, mxu_dtype=mxu_dtype),
        out_shape=jax.ShapeDtypeStruct((B, N, O), x.dtype),
        grid=grid,
        in_specs=[
            pl.BlockSpec((None, tn, K * C), lambda b, nt: (b, nt, 0)),   # XGU tile
            pl.BlockSpec((tn, D), lambda b, nt: (nt, 0)),                # E tile (raw N x D)
            pl.BlockSpec((D, K * C, O), lambda b, nt: (0, 0, 0)),        # weights (resident)
            pl.BlockSpec((D, O), lambda b, nt: (0, 0)),                  # bias pool (resident)
        ],
        out_specs=pl.BlockSpec((None, tn, O), lambda b, nt: (b, nt, 0)),
        compiler_params=pltpu.CompilerParams(
            dimension_semantics=("parallel", "parallel"),
            vmem_limit_bytes=vmem_cap,
        ),
    )(xgu, node_embeddings, wp, bias_pool)
    return out


# ----------------------------------------------------------------------------
# Pure-JAX replica of the PyTorch forward, for verification.
# ----------------------------------------------------------------------------
def avwgcn_ref(x, E, wpool, bpool, cheb_k):
    N = E.shape[0]
    S = jax.nn.softmax(jnp.maximum(E @ E.T, 0.0), axis=1)
    sup = [jnp.eye(N, dtype=S.dtype), S]
    for _ in range(2, cheb_k):
        sup.append(2.0 * S @ sup[-1] - sup[-2])
    sup = jnp.stack(sup, axis=0)
    weights = jnp.einsum('nd,dkio->nkio', E, wpool)
    bias = E @ bpool
    x_g = jnp.einsum('knm,bmc->bknc', sup, x)
    x_g = jnp.transpose(x_g, (0, 2, 1, 3))
    return jnp.einsum('bnki,nkio->bno', x_g, weights) + bias


if __name__ == "__main__":
    B, N, dim_in, dim_out, cheb_k, embed_dim = 2, 16, 4, 8, 3, 8

    key = jax.random.PRNGKey(0)
    k_x, k_e, k_w, k_b = jax.random.split(key, 4)
    x = jax.random.normal(k_x, (B, N, dim_in), dtype=jnp.float32)
    node_embeddings = jax.random.normal(k_e, (N, embed_dim), dtype=jnp.float32)
    weights_pool = 0.1 * jax.random.normal(
        k_w, (embed_dim, cheb_k, dim_in, dim_out), dtype=jnp.float32)
    bias_pool = 0.1 * jax.random.normal(k_b, (embed_dim, dim_out), dtype=jnp.float32)

    out = avwgcn_forward(x, node_embeddings, weights_pool, bias_pool, cheb_k)
    out = jax.block_until_ready(out)

    ref = avwgcn_ref(x, node_embeddings, weights_pool, bias_pool, cheb_k)
    assert out.shape == (B, N, dim_out)
    assert jnp.allclose(out, ref, atol=1e-4, rtol=1e-4), "mismatch vs JAX reference"
    print("KERNEL_OK")
</pallas_src>

<mosaic_0001>
module attributes {stable_mosaic.version = 11 : i64} {
  func.func @_cheb_prop_kernel(%arg0: memref<16x8xf32, #tpu.memory_space<vmem>>, %arg1: memref<16x8xf32, #tpu.memory_space<vmem>>, %arg2: memref<3x16x8xf32, #tpu.memory_space<vmem>>) attributes {dimension_semantics = [], scalar_prefetch = 0 : i64, scratch_operands = 0 : i64, tpu.core_type = #tpu.core_type<tc>} {
    %c0 = arith.constant 0 : index
    %c0_0 = arith.constant 0 : index
    %0 = vector.load %arg0[%c0, %c0_0] : memref<16x8xf32, #tpu.memory_space<vmem>>, vector<16x8xf32>
    %c0_1 = arith.constant 0 : index
    %c0_2 = arith.constant 0 : index
    %1 = vector.load %arg1[%c0_1, %c0_2] : memref<16x8xf32, #tpu.memory_space<vmem>>, vector<16x8xf32>
    %cst = arith.constant dense<0.000000e+00> : vector<16x16xf32>
    %2 = tpu.matmul %0, %0, %cst {dimension_numbers = #tpu.dot_dimension_numbers<[1], [1], [0], [0], [0, 0, 1, 0], [], []>} : vector<16x8xf32>, vector<16x8xf32>, vector<16x16xf32> -> vector<16x16xf32>
    %cst_3 = arith.constant 0.000000e+00 : f32
    %3 = vector.broadcast %cst_3 : f32 to vector<16x16xf32>
    %4 = arith.maximumf %2, %3 : vector<16x16xf32>
    %cst_4 = arith.constant dense<0xFF800000> : vector<16xf32>
    %5 = vector.multi_reduction <maximumf>, %4, %cst_4 [1] : vector<16x16xf32> to vector<16xf32>
    %6 = vector.shape_cast %5 : vector<16xf32> to vector<16x1xf32>
    %7 = vector.broadcast %6 : vector<16x1xf32> to vector<16x16xf32>
    %8 = arith.subf %4, %7 : vector<16x16xf32>
    %9 = math.exp %8 : vector<16x16xf32>
    %cst_5 = arith.constant dense<0.000000e+00> : vector<16xf32>
    %10 = vector.multi_reduction <add>, %9, %cst_5 [1] : vector<16x16xf32> to vector<16xf32>
    %11 = vector.shape_cast %10 : vector<16xf32> to vector<16x1xf32>
    %12 = tpu.reciprocal %11 {approx = true} : vector<16x1xf32> -> vector<16x1xf32>
    %13 = arith.mulf %11, %12 : vector<16x1xf32>
    %cst_6 = arith.constant 2.000000e+00 : f32
    %14 = vector.broadcast %cst_6 : f32 to vector<16x1xf32>
    %15 = arith.subf %14, %13 : vector<16x1xf32>
    %16 = arith.mulf %12, %15 : vector<16x1xf32>
    %17 = vector.broadcast %16 : vector<16x1xf32> to vector<16x16xf32>
    %18 = arith.mulf %9, %17 : vector<16x16xf32>
    %c0_7 = arith.constant 0 : index
    %c0_8 = arith.constant 0 : index
    %c0_9 = arith.constant 0 : index
    %19 = vector.load %arg2[%c0_7, %c0_8, %c0_9] : memref<3x16x8xf32, #tpu.memory_space<vmem>>, vector<1x16x8xf32>
    %20 = vector.shape_cast %19 : vector<1x16x8xf32> to vector<16x8xf32>
    %21 = vector.shape_cast %1 : vector<16x8xf32> to vector<1x16x8xf32>
    tpu.vector_store %arg2[%c0_7, %c0_8, %c0_9], %21 {strides = array<i32>} : memref<3x16x8xf32, #tpu.memory_space<vmem>>, vector<1x16x8xf32>,
    %cst_10 = arith.constant dense<0.000000e+00> : vector<16x8xf32>
    %22 = tpu.matmul %18, %1, %cst_10 {dimension_numbers = #tpu.dot_dimension_numbers<[1], [0], [0], [1], [0, 0, 1, 1], [], []>} : vector<16x16xf32>, vector<16x8xf32>, vector<16x8xf32> -> vector<16x8xf32>
    %c1 = arith.constant 1 : index
    %c0_11 = arith.constant 0 : index
    %c0_12 = arith.constant 0 : index
    %23 = vector.load %arg2[%c1, %c0_11, %c0_12] : memref<3x16x8xf32, #tpu.memory_space<vmem>>, vector<1x16x8xf32>
    %24 = vector.shape_cast %23 : vector<1x16x8xf32> to vector<16x8xf32>
    %25 = vector.shape_cast %22 : vector<16x8xf32> to vector<1x16x8xf32>
    tpu.vector_store %arg2[%c1, %c0_11, %c0_12], %25 {strides = array<i32>} : memref<3x16x8xf32, #tpu.memory_space<vmem>>, vector<1x16x8xf32>,
    %cst_13 = arith.constant dense<0.000000e+00> : vector<16x8xf32>
    %26 = tpu.matmul %18, %22, %cst_13 {dimension_numbers = #tpu.dot_dimension_numbers<[1], [0], [0], [1], [0, 0, 1, 1], [], []>} : vector<16x16xf32>, vector<16x8xf32>, vector<16x8xf32> -> vector<16x8xf32>
    %cst_14 = arith.constant 2.000000e+00 : f32
    %27 = vector.broadcast %cst_14 : f32 to vector<16x8xf32>
    %28 = arith.mulf %27, %26 : vector<16x8xf32>
    %29 = arith.subf %28, %1 : vector<16x8xf32>
    %c2 = arith.constant 2 : index
    %c0_15 = arith.constant 0 : index
    %c0_16 = arith.constant 0 : index
    %30 = vector.load %arg2[%c2, %c0_15, %c0_16] : memref<3x16x8xf32, #tpu.memory_space<vmem>>, vector<1x16x8xf32>
    %31 = vector.shape_cast %30 : vector<1x16x8xf32> to vector<16x8xf32>
    %32 = vector.shape_cast %29 : vector<16x8xf32> to vector<1x16x8xf32>
    tpu.vector_store %arg2[%c2, %c0_15, %c0_16], %32 {strides = array<i32>} : memref<3x16x8xf32, #tpu.memory_space<vmem>>, vector<1x16x8xf32>,
    return
  }
}

</mosaic_0001>

<llo_original>
// kernel: tpu_custom_call.1
$region0: #{tpu_custom_call.1}
  #allocation0 [shape = 'u32[]', space=smem, size = 0x4, offset = 0x4, fixed_abs, tag = 'smem constant byte address 0x4 - core index']
  #allocation1 [shape = 'u32[144,128]{1,0:T(1,128)}', space=vmem, size = 0x12000, scoped, tag = 'internal scratch']
  %s0 = inlined_call_operand.vmem [shape: f32[16,8], index: 0, kind: input, shape index: {}]
  %s1 = inlined_call_operand.vmem [shape: f32[16,8], index: 1, kind: input, shape index: {}]
  %s2 = inlined_call_operand.vmem [shape: f32[3,16,8], index: 2, kind: output, shape index: {}]
  %s3 = sld [smem:[#allocation0]]
  $region18: #{tpu_custom_call.1} parent=0
    _
  %s5 = ssub.s32 1, %s3
  %s6 = scalar_select 0, %s5, %s3
  // Predicated region
  $region2: #{tpu_custom_call.1} parent=0 // pred_check
    _
  $region3: #{tpu_custom_call.1} parent=0 // pred_check_branch
    %8 = sbr.rel (0) target = $region5
  $region4: #{tpu_custom_call.1} parent=0 // pred_region
    _
  $region5: #{tpu_custom_call.1} parent=0 // pred_fallthru
    _
  // Predicated region
  $region6: #{tpu_custom_call.1} parent=0 // pred_check
    _
  $region7: #{tpu_custom_call.1} parent=0 // pred_check_branch
    %10 = sbr.rel (0) target = $region9
  $region8: #{tpu_custom_call.1} parent=0 // pred_region
    _
  $region9: #{tpu_custom_call.1} parent=0 // pred_fallthru
    _
  %v11 = vld [vmem:[%s0] sm:$0xff]
  %v12 = vld [vmem:[%s0 + $0x8] sm:$0xff]
  %v13 = vld [vmem:[%s1] sm:$0xff]
  %v14 = vld [vmem:[%s1 + $0x8] sm:$0xff]
  %vm15 = vcmask 64512
  %v17 = vsel %vm15, %v11, 0
  %v20 = vsel %vm15, %v12, 0
  %22 = vmatprep.subr.mxu0 0.0
  %23 = vmatpush1.xpose.msra.mxu0 %v17
  %24 = vmatprep.subr.mxu0 0.0
  %25 = vmatpush1.xpose.msra.mxu0 %v20
  %26 = vmatprep.subr.mxu0 0.0
  %27 = vmatpush1.xpose.msra.mxu0 0.0
  %28 = vmatprep.subr.mxu0 0.0
  %29 = vmatpush1.xpose.msra.mxu0 0.0
  %30 = vmatprep.subr.mxu0 0.0
  %31 = vmatpush1.xpose.msra.mxu0 0.0
  %32 = vmatprep.subr.mxu0 0.0
  %33 = vmatpush1.xpose.msra.mxu0 0.0
  %34 = vmatprep.subr.mxu0 0.0
  %35 = vmatpush1.xpose.msra.mxu0 0.0
  %36 = vmatprep.subr.mxu0 0.0
  %37 = vmatpush1.xpose.msra.mxu0 0.0
  %38 = vmatprep.subr.mxu0 0.0
  %39 = vmatpush1.xpose.msra.mxu0 0.0
  %40 = vmatprep.subr.mxu0 0.0
  %41 = vmatpush1.xpose.msra.mxu0 0.0
  %42 = vmatprep.subr.mxu0 0.0
  %43 = vmatpush1.xpose.msra.mxu0 0.0
  %44 = vmatprep.subr.mxu0 0.0
  %45 = vmatpush1.xpose.msra.mxu0 0.0
  %46 = vmatprep.subr.mxu0 0.0
  %47 = vmatpush1.xpose.msra.mxu0 0.0
  %48 = vmatprep.subr.mxu0 0.0
  %49 = vmatpush1.xpose.msra.mxu0 0.0
  %50 = vmatprep.subr.mxu0 0.0
  %51 = vmatpush1.xpose.msra.mxu0 0.0
  %52 = vmatprep.subr.mxu0 0.0
  %53 = vmatpush1.xpose.msra.mxu0 0.0
  %54 = vmatprep.subr.mxu0 0.0
  %55 = vmatpush1.xpose.msra.mxu0 0.0
  %56 = vmatprep.subr.mxu0 0.0
  %57 = vmatpush1.xpose.msra.mxu0 0.0
  %58 = vmatprep.subr.mxu0 0.0
  %59 = vmatpush1.xpose.msra.mxu0 0.0
  %60 = vmatprep.subr.mxu0 0.0
  %61 = vmatpush1.xpose.msra.mxu0 0.0
  %62 = vmatprep.subr.mxu0 0.0
  %63 = vmatpush1.xpose.msra.mxu0 0.0
  %64 = vmatprep.subr.mxu0 0.0
  %65 = vmatpush1.xpose.msra.mxu0 0.0
  %66 = vmatprep.subr.mxu0 0.0
  %67 = vmatpush1.xpose.msra.mxu0 0.0
  %68 = vmatprep.subr.mxu0 0.0
  %69 = vmatpush1.xpose.msra.mxu0 0.0
  %70 = vmatprep.subr.mxu0 0.0
  %71 = vmatpush1.xpose.msra.mxu0 0.0
  %72 = vmatprep.subr.mxu0 0.0
  %73 = vmatpush1.xpose.msra.mxu0 0.0
  %74 = vmatprep.subr.mxu0 0.0
  %75 = vmatpush1.xpose.msra.mxu0 0.0
  %76 = vmatprep.subr.mxu0 0.0
  %77 = vmatpush1.xpose.msra.mxu0 0.0
  %78 = vmatprep.subr.mxu0 0.0
  %79 = vmatpush1.xpose.msra.mxu0 0.0
  %80 = vmatprep.subr.mxu0 0.0
  %81 = vmatpush1.xpose.msra.mxu0 0.0
  %82 = vmatprep.subr.mxu0 0.0
  %83 = vmatpush1.xpose.msra.mxu0 0.0
  %84 = vmatprep.subr.mxu0 0.0
  %85 = vmatpush1.xpose.msra.mxu0 0.0
  %86 = vmatprep.mubr.f32.mxu0 0.0
  %87 = vmatmul.mubr.f32.gmra.mrb[0].mxu0 %v17
  %v88 = vpop.f32.mrb[0].mxu0
  %v89 = vadd.f32 0.0, %v88
  %v90 = vpop.f32.mrb[0].mxu0
  %91 = vmatprep.mubr.f32.mxu0 0.0
  %92 = vmatmul.mubr.f32.gmra.mrb[0].mxu0 %v20
  %v93 = vpop.f32.mrb[0].mxu0
  %v94 = vadd.f32 0.0, %v93
  %v95 = vpop.f32.mrb[0].mxu0
  %96 = vdwg.mxu0
  %v97 = vmax.f32 %v89, 0.0
  %v98 = vmax.f32 %v94, 0.0
  %vm99 = vcmask 130048
  %v100 = vsel %vm99, %v97, -inf
  %101 = vmax.xlane.f32.xlu0 %v100
  %v102 = vpop.xlane.xlu0 %101
  %v103 = vsel %vm99, %v98, -inf
  %104 = vmax.xlane.f32.xlu0 %v103
  %v105 = vpop.xlane.xlu0 %104
  %v106 = vsub.f32 %v97, %v102
  %v107 = vsub.f32 %v98, %v105
  %v108 = vmul.f32 %v106, 1.442695
  %v109 = vpow.pop %v108
  %v110 = vmul.f32 %v107, 1.442695
  %v111 = vpow.pop %v110
  %v112 = vsel %vm99, %v109, 0.0
  %113 = vadd.xlane.f32.xlu0 %v112
  %v114 = vpop.xlane.xlu0 %113
  %v115 = vsel %vm99, %v111, 0.0
  %116 = vadd.xlane.f32.xlu0 %v115
  %v117 = vpop.xlane.xlu0 %116
  %v118 = vrcp.pop %v114
  %v119 = vrcp.pop %v117
  %v120 = vmul.f32 %v114, %v118
  %v121 = vmul.f32 %v117, %v119
  %v122 = vsub.f32 2.0, %v120
  %v123 = vsub.f32 2.0, %v121
  %v124 = vmul.f32 %v118, %v122
  %v125 = vmul.f32 %v119, %v123
  %v126 = vmul.f32 %v109, %v124
  %v127 = vmul.f32 %v111, %v125
  %128 = vst.msk [vmem:[%s2] sm:$0xff] %vm15, %v13
  %129 = vst.msk [vmem:[%s2 + $0x8] sm:$0xff] %vm15, %v14
  %v131 = vsel %vm99, %v126, 0
  %v134 = vsel %vm99, %v127, 0
  %136 = vmatprep.subr.mxu0 0.0
  %137 = vmatpush1.msra.mxu0 %v13
  %138 = vmatprep.subr.mxu0 0.0
  %139 = vmatpush1.msra.mxu0 %v14
  %140 = vmatprep.subr.mxu0 0.0
  %141 = vmatpush1.msra.mxu0 0.0
  %142 = vmatprep.subr.mxu0 0.0
  %143 = vmatpush1.msra.mxu0 0.0
  %144 = vmatprep.subr.mxu0 0.0
  %145 = vmatpush1.msra.mxu0 0.0
  %146 = vmatprep.subr.mxu0 0.0
  %147 = vmatpush1.msra.mxu0 0.0
  %148 = vmatprep.subr.mxu0 0.0
  %149 = vmatpush1.msra.mxu0 0.0
  %150 = vmatprep.subr.mxu0 0.0
  %151 = vmatpush1.msra.mxu0 0.0
  %152 = vmatprep.subr.mxu0 0.0
  %153 = vmatpush1.msra.mxu0 0.0
  %154 = vmatprep.subr.mxu0 0.0
  %155 = vmatpush1.msra.mxu0 0.0
  %156 = vmatprep.subr.mxu0 0.0
  %157 = vmatpush1.msra.mxu0 0.0
  %158 = vmatprep.subr.mxu0 0.0
  %159 = vmatpush1.msra.mxu0 0.0
  %160 = vmatprep.subr.mxu0 0.0
  %161 = vmatpush1.msra.mxu0 0.0
  %162 = vmatprep.subr.mxu0 0.0
  %163 = vmatpush1.msra.mxu0 0.0
  %164 = vmatprep.subr.mxu0 0.0
  %165 = vmatpush1.msra.mxu0 0.0
  %166 = vmatprep.subr.mxu0 0.0
  %167 = vmatpush1.msra.mxu0 0.0
  %168 = vmatprep.subr.mxu0 0.0
  %169 = vmatpush1.msra.mxu0 0.0
  %170 = vmatprep.subr.mxu0 0.0
  %171 = vmatpush1.msra.mxu0 0.0
  %172 = vmatprep.subr.mxu0 0.0
  %173 = vmatpush1.msra.mxu0 0.0
  %174 = vmatprep.subr.mxu0 0.0
  %175 = vmatpush1.msra.mxu0 0.0
  %176 = vmatprep.subr.mxu0 0.0
  %177 = vmatpush1.msra.mxu0 0.0
  %178 = vmatprep.subr.mxu0 0.0
  %179 = vmatpush1.msra.mxu0 0.0
  %180 = vmatprep.subr.mxu0 0.0
  %181 = vmatpush1.msra.mxu0 0.0
  %182 = vmatprep.subr.mxu0 0.0
  %183 = vmatpush1.msra.mxu0 0.0
  %184 = vmatprep.subr.mxu0 0.0
  %185 = vmatpush1.msra.mxu0 0.0
  %186 = vmatprep.subr.mxu0 0.0
  %187 = vmatpush1.msra.mxu0 0.0
  %188 = vmatprep.subr.mxu0 0.0
  %189 = vmatpush1.msra.mxu0 0.0
  %190 = vmatprep.subr.mxu0 0.0
  %191 = vmatpush1.msra.mxu0 0.0
  %192 = vmatprep.subr.mxu0 0.0
  %193 = vmatpush1.msra.mxu0 0.0
  %194 = vmatprep.subr.mxu0 0.0
  %195 = vmatpush1.msra.mxu0 0.0
  %196 = vmatprep.subr.mxu0 0.0
  %197 = vmatpush1.msra.mxu0 0.0
  %198 = vmatprep.subr.mxu0 0.0
  %199 = vmatpush1.msra.mxu0 0.0
  %200 = vmatprep.mubr.f32.mxu0 0.0
  %201 = vmatmul.mubr.f32.gmra.mrb[0].mxu0 %v131
  %v202 = vpop.f32.mrb[0].mxu0
  %v203 = vadd.f32 0.0, %v202
  %v204 = vpop.f32.mrb[0].mxu0
  %205 = vmatprep.mubr.f32.mxu0 0.0
  %206 = vmatmul.mubr.f32.gmra.mrb[0].mxu0 %v134
  %v207 = vpop.f32.mrb[0].mxu0
  %v208 = vadd.f32 0.0, %v207
  %v209 = vpop.f32.mrb[0].mxu0
  %210 = vdwg.mxu0
  %s211 = scalar_lea.vmem %s2, 16
  %212 = vst.msk [vmem:[%s211] sm:$0xff] %vm15, %v203
  %213 = vst.msk [vmem:[%s211 + $0x8] sm:$0xff] %vm15, %v208
  %214 = vmatprep.subr.mxu0 0.0
  %215 = vmatpush1.msra.mxu0 %v203
  %216 = vmatprep.subr.mxu0 0.0
  %217 = vmatpush1.msra.mxu0 %v208
  %218 = vmatprep.subr.mxu0 0.0
  %219 = vmatpush1.msra.mxu0 0.0
  %220 = vmatprep.subr.mxu0 0.0
  %221 = vmatpush1.msra.mxu0 0.0
  %222 = vmatprep.subr.mxu0 0.0
  %223 = vmatpush1.msra.mxu0 0.0
  %224 = vmatprep.subr.mxu0 0.0
  %225 = vmatpush1.msra.mxu0 0.0
  %226 = vmatprep.subr.mxu0 0.0
  %227 = vmatpush1.msra.mxu0 0.0
  %228 = vmatprep.subr.mxu0 0.0
  %229 = vmatpush1.msra.mxu0 0.0
  %230 = vmatprep.subr.mxu0 0.0
  %231 = vmatpush1.msra.mxu0 0.0
  %232 = vmatprep.subr.mxu0 0.0
  %233 = vmatpush1.msra.mxu0 0.0
  %234 = vmatprep.subr.mxu0 0.0
  %235 = vmatpush1.msra.mxu0 0.0
  %236 = vmatprep.subr.mxu0 0.0
  %237 = vmatpush1.msra.mxu0 0.0
  %238 = vmatprep.subr.mxu0 0.0
  %239 = vmatpush1.msra.mxu0 0.0
  %240 = vmatprep.subr.mxu0 0.0
  %241 = vmatpush1.msra.mxu0 0.0
  %242 = vmatprep.subr.mxu0 0.0
  %243 = vmatpush1.msra.mxu0 0.0
  %244 = vmatprep.subr.mxu0 0.0
  %245 = vmatpush1.msra.mxu0 0.0
  %246 = vmatprep.subr.mxu0 0.0
  %247 = vmatpush1.msra.mxu0 0.0
  %248 = vmatprep.subr.mxu0 0.0
  %249 = vmatpush1.msra.mxu0 0.0
  %250 = vmatprep.subr.mxu0 0.0
  %251 = vmatpush1.msra.mxu0 0.0
  %252 = vmatprep.subr.mxu0 0.0
  %253 = vmatpush1.msra.mxu0 0.0
  %254 = vmatprep.subr.mxu0 0.0
  %255 = vmatpush1.msra.mxu0 0.0
  %256 = vmatprep.subr.mxu0 0.0
  %257 = vmatpush1.msra.mxu0 0.0
  %258 = vmatprep.subr.mxu0 0.0
  %259 = vmatpush1.msra.mxu0 0.0
  %260 = vmatprep.subr.mxu0 0.0
  %261 = vmatpush1.msra.mxu0 0.0
  %262 = vmatprep.subr.mxu0 0.0
  %263 = vmatpush1.msra.mxu0 0.0
  %264 = vmatprep.subr.mxu0 0.0
  %265 = vmatpush1.msra.mxu0 0.0
  %266 = vmatprep.subr.mxu0 0.0
  %267 = vmatpush1.msra.mxu0 0.0
  %268 = vmatprep.subr.mxu0 0.0
  %269 = vmatpush1.msra.mxu0 0.0
  %270 = vmatprep.subr.mxu0 0.0
  %271 = vmatpush1.msra.mxu0 0.0
  %272 = vmatprep.subr.mxu0 0.0
  %273 = vmatpush1.msra.mxu0 0.0
  %274 = vmatprep.subr.mxu0 0.0
  %275 = vmatpush1.msra.mxu0 0.0
  %276 = vmatprep.subr.mxu0 0.0
  %277 = vmatpush1.msra.mxu0 0.0
  %278 = vmatprep.mubr.f32.mxu0 0.0
  %279 = vmatmul.mubr.f32.gmra.mrb[0].mxu0 %v131
  %v280 = vpop.f32.mrb[0].mxu0
  %v281 = vadd.f32 0.0, %v280
  %v282 = vpop.f32.mrb[0].mxu0
  %283 = vmatprep.mubr.f32.mxu0 0.0
  %284 = vmatmul.mubr.f32.gmra.mrb[0].mxu0 %v134
  %v285 = vpop.f32.mrb[0].mxu0
  %v286 = vadd.f32 0.0, %v285
  %v287 = vpop.f32.mrb[0].mxu0
  %288 = vdwg.mxu0
  %v289 = vmul.f32 %v281, 2.0
  %v290 = vmul.f32 %v286, 2.0
  %v291 = vsub.f32 %v289, %v13
  %v292 = vsub.f32 %v290, %v14
  %s293 = scalar_lea.vmem %s2, 32
  %294 = vst.msk [vmem:[%s293] sm:$0xff] %vm15, %v291
  %295 = vst.msk [vmem:[%s293 + $0x8] sm:$0xff] %vm15, %v292
  // Predicated region
  $region10: #{tpu_custom_call.1} parent=0 // pred_check
    _
  $region11: #{tpu_custom_call.1} parent=0 // pred_check_branch
    %297 = sbr.rel (0) target = $region13
  $region12: #{tpu_custom_call.1} parent=0 // pred_region
    _
  $region13: #{tpu_custom_call.1} parent=0 // pred_fallthru
    _
  // Predicated region
  $region14: #{tpu_custom_call.1} parent=0 // pred_check
    _
  $region15: #{tpu_custom_call.1} parent=0 // pred_check_branch
    %299 = sbr.rel (0) target = $region17
  $region16: #{tpu_custom_call.1} parent=0 // pred_region
    _
  $region17: #{tpu_custom_call.1} parent=0 // pred_fallthru
    _

</llo_original>
